<compile_context>
chip_gen: v7x
topology: tpu7x:2x2x1
jax: 0.10.0
libtpu: 0.0.40
codegen_flags: <defaults>
</compile_context>

<pallas_src>
import functools

import jax
import jax.numpy as jnp
from jax.experimental import pallas as pl
from jax.experimental.pallas import tpu as pltpu

_MB = 1024 * 1024


def _round_up(x, m):
    return (x + m - 1) // m * m


def _vmem_est(in_bytes, out_bytes, scratch_bytes=0):
    # 2x inputs / outputs for double buffering + scratch + slack.
    return 2 * in_bytes + 2 * out_bytes + scratch_bytes + 2 * _MB


def _cparams(sems, vmem_bytes):
    # Computed per-kernel budget, capped at 48 MB so the same kernels compile on
    # v7x (64 MiB physical VMEM / core).  TODO(synk): if an estimate exceeds the
    # cap at production resolutions, add an H-tile grid axis instead of raising it.
    vmem_bytes = int(min(max(vmem_bytes, 4 * _MB), 48 * _MB))
    return pltpu.CompilerParams(dimension_semantics=sems,
                                vmem_limit_bytes=vmem_bytes)


# ----------------------------------------------------------------------------
# Kernel 1: fused (X @ W) * scale + shift + ReLU   (1x1 conv branch)
# ----------------------------------------------------------------------------
def _matmul_affine_relu_kernel(x_ref, w_ref, scale_ref, shift_ref, o_ref):
    y = jnp.dot(x_ref[...], w_ref[...], preferred_element_type=jnp.float32)
    y = y * scale_ref[...] + shift_ref[...]
    o_ref[...] = jnp.maximum(y, 0.0).astype(o_ref.dtype)


def matmul_affine_relu(x, w, scale, shift, out_dtype=jnp.bfloat16, tm=256):
    M, K = x.shape
    N = w.shape[-1]
    tm = min(tm, _round_up(M, 8))
    Mp = _round_up(M, tm)
    if Mp != M:                       # pad M instead of collapsing to one block
        x = jnp.pad(x, ((0, Mp - M), (0, 0)))
    ib = tm * K * x.dtype.itemsize + K * N * w.dtype.itemsize + 2 * N * 4
    ob = tm * N * jnp.dtype(out_dtype).itemsize
    out = pl.pallas_call(
        _matmul_affine_relu_kernel,
        out_shape=jax.ShapeDtypeStruct((Mp, N), out_dtype),
        grid_spec=pltpu.PrefetchScalarGridSpec(
            num_scalar_prefetch=0,
            grid=(Mp // tm,),
            in_specs=[
                pl.BlockSpec((tm, K), lambda i: (i, 0)),
                pl.BlockSpec((K, N), lambda i: (0, 0)),
                pl.BlockSpec((1, N), lambda i: (0, 0)),
                pl.BlockSpec((1, N), lambda i: (0, 0)),
            ],
            out_specs=pl.BlockSpec((tm, N), lambda i: (i, 0)),
        ),
        compiler_params=_cparams(("parallel",), _vmem_est(ib, ob)),
    )(x, w, scale, shift)
    return out[:M] if Mp != M else out


# ----------------------------------------------------------------------------
# Kernel 2: global average pool (tiled over H, f32 accumulation) + 1x1 conv +
# BN + ReLU.  Output is the (B, depth) pooled vector only - its contribution to
# the bottleneck is pre-folded in the wrapper (never broadcast to HBM/VMEM).
# ----------------------------------------------------------------------------
def _gap_conv_bn_relu_kernel(x_ref, w_ref, scale_ref, shift_ref, o_ref, acc_ref,
                             *, inv_hw):
    i = pl.program_id(0)
    part = jnp.sum(x_ref[...].astype(jnp.float32), axis=(1, 2))       # (B, C)

    @pl.when(i == 0)
    def _():
        acc_ref[...] = part

    @pl.when(i != 0)
    def _():
        acc_ref[...] = acc_ref[...] + part

    @pl.when(i == pl.num_programs(0) - 1)
    def _():
        pooled = acc_ref[...] * inv_hw
        y = jnp.dot(pooled, w_ref[...], preferred_element_type=jnp.float32)
        y = y * scale_ref[...] + shift_ref[...]
        o_ref[...] = jnp.maximum(y, 0.0)


def global_pool_conv_bn_relu(x, w, scale, shift):
    B, H, W, C = x.shape
    N = w.shape[-1]
    # largest H tile dividing H that keeps the input block around <= 4 MB
    max_th = max(1, (4 * _MB) // max(1, B * W * C * x.dtype.itemsize))
    th = 1
    for t in range(1, H + 1):
        if H % t == 0 and t <= max_th:
            th = t
    ib = B * th * W * C * x.dtype.itemsize + C * N * 4 + 2 * N * 4
    ob = B * N * 4
    sb = B * C * 4
    return pl.pallas_call(
        functools.partial(_gap_conv_bn_relu_kernel, inv_hw=1.0 / float(H * W)),
        out_shape=jax.ShapeDtypeStruct((B, N), jnp.float32),
        grid_spec=pltpu.PrefetchScalarGridSpec(
            num_scalar_prefetch=0,
            grid=(H // th,),
            in_specs=[
                pl.BlockSpec((B, th, W, C), lambda i: (0, i, 0, 0)),
                pl.BlockSpec((C, N), lambda i: (0, 0)),
                pl.BlockSpec((1, N), lambda i: (0, 0)),
                pl.BlockSpec((1, N), lambda i: (0, 0)),
            ],
            out_specs=pl.BlockSpec((B, N), lambda i: (0, 0)),
            scratch_shapes=[pltpu.VMEM((B, C), jnp.float32)],
        ),
        compiler_params=_cparams(("arbitrary",), _vmem_est(ib, ob, sb)),
    )(x, w, scale, shift)


# ----------------------------------------------------------------------------
# Kernel 3: dilated 3x3 conv + BN + ReLU.
# Grid (B, cout_tiles, cin_tiles); Cin is the reduction axis.  All dilated
# branches share ONE dmax-padded input (window base = dmax - d).  Per spatial
# row-band the 9 tap dots are chained into a local value and acc_ref is touched
# once per cin tile (single RMW instead of 9).
# ----------------------------------------------------------------------------
def _conv3x3_bn_relu_kernel(xp_ref, w_ref, scale_ref, shift_ref, o_ref, acc_ref,
                            *, dilation, base, H, W, W8, bands):
    ci = pl.program_id(2)
    d = dilation
    cin_t = xp_ref.shape[-1]
    for (h0, hr) in bands:
        part = None
        for ky in range(3):
            for kx in range(3):
                win = xp_ref[0, pl.ds(base + ky * d + h0, hr),
                             pl.ds(base + kx * d, W8), :]        # (hr, W8, cin_t)
                t = jnp.dot(win.reshape(hr * W8, cin_t), w_ref[ky, kx],
                            preferred_element_type=jnp.float32)
                part = t if part is None else part + t
        rows = pl.ds(h0 * W8, hr * W8)

        @pl.when(ci == 0)
        def _(part=part, rows=rows):
            acc_ref[rows, :] = part

        @pl.when(ci != 0)
        def _(part=part, rows=rows):
            acc_ref[rows, :] = acc_ref[rows, :] + part

    @pl.when(ci == pl.num_programs(2) - 1)
    def _():
        cout_t = o_ref.shape[-1]
        y = acc_ref[...].reshape(H, W8, cout_t)[:, :W, :]
        y = y * scale_ref[0] + shift_ref[0]
        o_ref[...] = jnp.maximum(y, 0.0)[None].astype(o_ref.dtype)


def conv3x3_bn_relu(xp, w, scale, shift, dilation, dmax, H, W,
                    out_dtype=jnp.bfloat16, tile_cin=128, tile_cout=256,
                    band_rows=512):
    B = xp.shape[0]
    Cin = xp.shape[-1]
    Cout = w.shape[-1]
    W8 = _round_up(W, 8)
    Hp, Wp = H + 2 * dmax, W8 + 2 * dmax
    assert xp.shape[1] == Hp and xp.shape[2] == Wp
    base = dmax - dilation
    tci = tile_cin if Cin % tile_cin == 0 else Cin
    tco = tile_cout if Cout % tile_cout == 0 else Cout
    n_ci, n_co = Cin // tci, Cout // tco
    hr = max(1, min(H, band_rows // W8))
    bands = tuple((h0, min(hr, H - h0)) for h0 in range(0, H, hr))
    ib = Hp * Wp * tci * 2 + 9 * tci * tco * 2 + 2 * tco * 4
    ob = H * W * tco * jnp.dtype(out_dtype).itemsize
    sb = H * W8 * tco * 4
    return pl.pallas_call(
        functools.partial(_conv3x3_bn_relu_kernel, dilation=dilation, base=base,
                          H=H, W=W, W8=W8, bands=bands),
        out_shape=jax.ShapeDtypeStruct((B, H, W, Cout), out_dtype),
        grid_spec=pltpu.PrefetchScalarGridSpec(
            num_scalar_prefetch=0,
            grid=(B, n_co, n_ci),
            in_specs=[
                pl.BlockSpec((1, Hp, Wp, tci), lambda b, co, ci: (b, 0, 0, ci)),
                pl.BlockSpec((3, 3, tci, tco), lambda b, co, ci: (0, 0, ci, co)),
                pl.BlockSpec((1, tco), lambda b, co, ci: (0, co)),
                pl.BlockSpec((1, tco), lambda b, co, ci: (0, co)),
            ],
            out_specs=pl.BlockSpec((1, H, W, tco), lambda b, co, ci: (b, 0, 0, co)),
            scratch_shapes=[pltpu.VMEM((H * W8, tco), jnp.float32)],
        ),
        compiler_params=_cparams(("parallel", "parallel", "arbitrary"),
                                 _vmem_est(ib, ob, sb)),
    )(xp, w, scale, shift)


# ----------------------------------------------------------------------------
# Kernel 4: fused ASPP bottleneck.
# Consumes the four spatial branches directly (the 5-way concat is never
# materialized); the image-pool branch arrives pre-folded as an additive
# (1,H,W8,tco) map added in the epilogue.  Per branch the interior of a single
# zero-bordered VMEM scratch is overwritten once (aligned store at col 8), only
# the border strips the taps read are re-zeroed, and the 9 tap dots are chained
# locally so acc_ref is touched once per branch.  Epilogue: BN affine + PReLU.
# ----------------------------------------------------------------------------
def _bottleneck_kernel(o0_ref, o1_ref, o2_ref, o3_ref, pool_ref, w_ref,
                       scale_ref, shift_ref, alpha_ref, out_ref,
                       pad_ref, acc_ref, *, H, W, W8, depth, CS, bands):
    Wb = pad_ref.shape[1]
    zdt = pad_ref.dtype
    # zero only the border strips the taps read (cols [0,CS) aligned, right tail,
    # top/bottom halo rows); the interior is fully overwritten per branch.
    pad_ref[0, :, :] = jnp.zeros((Wb, depth), zdt)
    pad_ref[H + 1, :, :] = jnp.zeros((Wb, depth), zdt)
    pad_ref[pl.ds(1, H), pl.ds(0, CS), :] = jnp.zeros((H, CS, depth), zdt)
    zr = Wb - (CS + W)
    pad_ref[pl.ds(1, H), pl.ds(CS + W, zr), :] = jnp.zeros((H, zr, depth), zdt)

    branch_refs = (o0_ref, o1_ref, o2_ref, o3_ref)
    for br in range(4):                         # [out0, out1, out2, out3]
        pad_ref[pl.ds(1, H), pl.ds(CS, W), :] = branch_refs[br][0]
        for (h0, hr) in bands:
            part = None
            for ky in range(3):
                for kx in range(3):
                    win = pad_ref[pl.ds(h0 + ky, hr), pl.ds(CS - 1 + kx, W8), :]
                    wk = w_ref[ky, kx, pl.ds(br * depth, depth), :]
                    t = jnp.dot(win.reshape(hr * W8, depth), wk,
                                preferred_element_type=jnp.float32)
                    part = t if part is None else part + t
            rows = pl.ds(h0 * W8, hr * W8)
            if br == 0:
                acc_ref[rows, :] = part
            else:
                acc_ref[rows, :] = acc_ref[rows, :] + part

    tco = out_ref.shape[-1]
    y = acc_ref[...].reshape(H, W8, tco) + pool_ref[0]     # + folded pool branch
    y = y * scale_ref[0] + shift_ref[0]
    alpha = alpha_ref[0, 0]
    y = jnp.where(y >= 0.0, y, alpha * y)                  # PReLU (shared alpha)
    out_ref[...] = y[None].astype(out_ref.dtype)


def bottleneck_conv_bn_prelu(o0, o1, o2, o3, pool_map, w_spatial, scale, shift,
                             alpha, tile_cout=128, band_rows=512):
    B, H, W, depth = o0.shape
    Cout = w_spatial.shape[-1]
    Kcat = w_spatial.shape[2]                  # 4 * depth
    W8 = _round_up(W, 8)
    CS = 8                                     # left border -> aligned interior store
    Wb = CS + W8 + 8
    tco = tile_cout if Cout % tile_cout == 0 else Cout
    n_co = Cout // tco
    hr = max(1, min(H, band_rows // W8))
    bands = tuple((h0, min(hr, H - h0)) for h0 in range(0, H, hr))
    ib = (4 * H * W * depth * 2 + H * W8 * tco * 4 + 9 * Kcat * tco * 2
          + 2 * tco * 4 + 4)
    ob = H * W8 * tco * 4
    sb = (H + 2) * Wb * depth * 2 + H * W8 * tco * 4
    return pl.pallas_call(
        functools.partial(_bottleneck_kernel, H=H, W=W, W8=W8, depth=depth,
                          CS=CS, bands=bands),
        out_shape=jax.ShapeDtypeStruct((B, H, W8, Cout), jnp.float32),
        grid_spec=pltpu.PrefetchScalarGridSpec(
            num_scalar_prefetch=0,
            grid=(B, n_co),
            in_specs=[
                pl.BlockSpec((1, H, W, depth), lambda b, co: (b, 0, 0, 0)),
                pl.BlockSpec((1, H, W, depth), lambda b, co: (b, 0, 0, 0)),
                pl.BlockSpec((1, H, W, depth), lambda b, co: (b, 0, 0, 0)),
                pl.BlockSpec((1, H, W, depth), lambda b, co: (b, 0, 0, 0)),
                pl.BlockSpec((1, H, W8, tco), lambda b, co: (b, 0, 0, co)),
                pl.BlockSpec((3, 3, Kcat, tco), lambda b, co: (0, 0, 0, co)),
                pl.BlockSpec((1, tco), lambda b, co: (0, co)),
                pl.BlockSpec((1, tco), lambda b, co: (0, co)),
                pl.BlockSpec((1, 1), lambda b, co: (0, 0)),
            ],
            out_specs=pl.BlockSpec((1, H, W8, tco), lambda b, co: (b, 0, 0, co)),
            scratch_shapes=[
                pltpu.VMEM((H + 2, Wb, depth), jnp.bfloat16),
                pltpu.VMEM((H * W8, tco), jnp.float32),
            ],
        ),
        compiler_params=_cparams(("parallel", "parallel"),
                                 _vmem_est(ib, ob, sb)),
    )(o0, o1, o2, o3, pool_map, w_spatial, scale, shift, alpha)


# ----------------------------------------------------------------------------
# Kernel 5: 1x1 classifier + bilinear upsample (MXU matmuls against precomputed
# row/col interpolation matrices) + Sigmoid.  feats arrive W8-padded so the
# (h*W8, cf) reshape is layout-free; zero rows of rwt neutralize the padding.
# Emits NCHW directly (lane-dense Wout); sigmoid uses the EUP approx reciprocal.
# ----------------------------------------------------------------------------
def _cls_upsample_sigmoid_kernel(f_ref, w_ref, b_ref, rh_ref, rwt_ref, o_ref,
                                 *, h, W8, num_classes):
    cf = f_ref.shape[-1]
    feats = f_ref[0].reshape(h * W8, cf)                 # free: W8 % 8 == 0
    ann = jnp.dot(feats, w_ref[...], preferred_element_type=jnp.float32)
    ann = (ann + b_ref[...]).reshape(h, W8, num_classes)
    rh = rh_ref[...]                                     # (Hout, h)
    rwt = rwt_ref[...]                                   # (W8, Wout), zero rows >= w
    for c in range(num_classes):
        t = jnp.dot(rh, ann[:, :, c], preferred_element_type=jnp.float32)
        u = jnp.dot(t, rwt, preferred_element_type=jnp.float32)
        o_ref[0, c] = pl.reciprocal(1.0 + jnp.exp(-u), approx=True)


def classifier_upsample_sigmoid(feats, cls_w, cls_b, rh, rwt):
    B, h, W8, cf = feats.shape
    num_classes = cls_w.shape[-1]
    Hout, Wout = rh.shape[0], rwt.shape[1]
    ib = (h * W8 * cf * 4 + cf * num_classes * 4 + num_classes * 4
          + Hout * h * 4 + W8 * Wout * 4)
    ob = num_classes * Hout * Wout * 4
    return pl.pallas_call(
        functools.partial(_cls_upsample_sigmoid_kernel,
                          h=h, W8=W8, num_classes=num_classes),
        out_shape=jax.ShapeDtypeStruct((B, num_classes, Hout, Wout), jnp.float32),
        grid_spec=pltpu.PrefetchScalarGridSpec(
            num_scalar_prefetch=0,
            grid=(B,),
            in_specs=[
                pl.BlockSpec((1, h, W8, cf), lambda b: (b, 0, 0, 0)),
                pl.BlockSpec((cf, num_classes), lambda b: (0, 0)),
                pl.BlockSpec((1, num_classes), lambda b: (0, 0)),
                pl.BlockSpec((Hout, h), lambda b: (0, 0)),
                pl.BlockSpec((W8, Wout), lambda b: (0, 0)),
            ],
            out_specs=pl.BlockSpec((1, num_classes, Hout, Wout),
                                   lambda b: (b, 0, 0, 0)),
        ),
        compiler_params=_cparams(("parallel",), _vmem_est(ib, ob)),
    )(feats, cls_w, cls_b, rh, rwt)


# ----------------------------------------------------------------------------
# Glue: BN folding, bilinear matrices, parameter init, forward.
# ----------------------------------------------------------------------------
def _bn_fold(bn, conv_bias, eps=1e-5):
    s = bn["gamma"] / jnp.sqrt(bn["var"] + eps)
    scale = s.reshape(1, -1)
    shift = (conv_bias * s + bn["beta"] - bn["mean"] * s).reshape(1, -1)
    return scale, shift


def _bilinear_matrix(out_size, in_size, align_corners=False):
    # NOTE: current PyTorch F.upsample/F.interpolate default is
    # align_corners=False; very old torch defaulted to True - flip the flag if
    # matching such a checkpoint.
    if in_size == 1:
        return jnp.ones((out_size, 1), jnp.float32)
    if out_size == in_size:
        return jnp.eye(out_size, dtype=jnp.float32)
    i = jnp.arange(out_size, dtype=jnp.float32)
    if align_corners:
        src = i * (in_size - 1) / max(out_size - 1, 1)
    else:
        scale = in_size / out_size
        src = jnp.clip((i + 0.5) * scale - 0.5, 0.0, None)
    i0f = jnp.floor(src)
    w1 = src - i0f
    i0 = jnp.clip(i0f.astype(jnp.int32), 0, in_size - 1)
    i1 = jnp.clip(i0 + 1, 0, in_size - 1)
    m = jnp.zeros((out_size, in_size), jnp.float32)
    rows = jnp.arange(out_size)
    m = m.at[rows, i0].add(1.0 - w1)
    m = m.at[rows, i1].add(w1)
    return m


def init_params(key, c_img, c_feat, depth, out_c, num_classes):
    ks = jax.random.split(key, 8)

    def w(k, shape):
        return 0.01 * jax.random.normal(k, shape, jnp.float32)   # normal_(0, 0.01)

    def bn(c):
        return dict(gamma=jnp.ones((c,), jnp.float32),
                    beta=jnp.zeros((c,), jnp.float32),
                    mean=jnp.zeros((c,), jnp.float32),
                    var=jnp.ones((c,), jnp.float32))

    return {
        "backbone_w": w(ks[0], (c_img, c_feat)),
        "backbone_b": jnp.zeros((c_feat,), jnp.float32),
        "conv_img_w": w(ks[1], (c_feat, depth)),
        "conv_img_b": jnp.zeros((depth,), jnp.float32),
        "bn_x": bn(depth),
        "conv0_w": w(ks[2], (c_feat, depth)),
        "conv0_b": jnp.zeros((depth,), jnp.float32),
        "bn_0": bn(depth),
        "conv1_w": w(ks[3], (3, 3, c_feat, depth)),
        "conv1_b": jnp.zeros((depth,), jnp.float32),
        "bn_1": bn(depth),
        "conv2_w": w(ks[4], (3, 3, c_feat, depth)),
        "conv2_b": jnp.zeros((depth,), jnp.float32),
        "bn_2": bn(depth),
        "conv3_w": w(ks[5], (3, 3, c_feat, depth)),
        "conv3_b": jnp.zeros((depth,), jnp.float32),
        "bn_3": bn(depth),
        "bottleneck_w": w(ks[6], (3, 3, 5 * depth, out_c)),
        "bottleneck_b": jnp.zeros((out_c,), jnp.float32),
        "bn": bn(out_c),
        "prelu_alpha": jnp.full((1, 1), 0.25, jnp.float32),
        "cls_w": w(ks[7], (out_c, num_classes)),
        "cls_b": jnp.zeros((num_classes,), jnp.float32),
    }


DILATIONS = (6, 12, 18)  # dilation_series == padding_series in Encoder.__init__


def aspp_forward(feats, p):
    B, H, W, Cf = feats.shape
    depth = p["conv0_w"].shape[-1]
    bf16 = jnp.bfloat16
    W8 = _round_up(W, 8)
    feats_bf = feats.astype(bf16)        # bf16 MXU operands, f32 accumulation

    # image-pool branch: AdaptiveAvgPool2d(1) -> 1x1 conv -> BN -> ReLU,
    # pooled in f32 (PyTorch parity).  Its bilinear upsample of a 1x1 map is a
    # constant broadcast; its bottleneck contribution is pre-folded below.
    sc_x, sh_x = _bn_fold(p["bn_x"], p["conv_img_b"])
    img = global_pool_conv_bn_relu(feats, p["conv_img_w"], sc_x, sh_x)  # (B,depth)

    # 1x1 branch.
    sc0, sh0 = _bn_fold(p["bn_0"], p["conv0_b"])
    out0 = matmul_affine_relu(feats_bf.reshape(B * H * W, Cf),
                              p["conv0_w"].astype(bf16), sc0, sh0,
                              out_dtype=bf16).reshape(B, H, W, depth)

    # dilated 3x3 branches: ONE shared dmax-padded buffer for all dilations.
    dmax = max(DILATIONS)
    xp = jnp.pad(feats_bf, ((0, 0), (dmax, dmax), (dmax, dmax + W8 - W), (0, 0)))
    douts = []
    for i, d in enumerate(DILATIONS, start=1):
        sci, shi = _bn_fold(p[f"bn_{i}"], p[f"conv{i}_b"])
        douts.append(conv3x3_bn_relu(xp, p[f"conv{i}_w"].astype(bf16),
                                     sci, shi, d, dmax, H, W, out_dtype=bf16))

    # bottleneck 3x3 conv + BN + PReLU over the virtual concat
    # [img, out0, out1, out2, out3] (channel order matches torch.cat).
    scb, shb = _bn_fold(p["bn"], p["bottleneck_b"])
    wb = p["bottleneck_w"]                              # (3,3,5*depth,out_c)
    w_pool = wb[:, :, :depth, :]
    w_spatial = wb[:, :, depth:, :].astype(bf16)
    out_c = wb.shape[-1]
    # Pre-fold the spatially-constant pool branch: tap validity (zero padding of
    # the 3x3 conv) per row/col case x per-tap img@W vectors -> additive map.
    rv = jnp.stack([jnp.arange(H) > 0, jnp.ones((H,), bool),
                    jnp.arange(H) < H - 1], axis=1).astype(jnp.float32)   # (H,3)
    cv = jnp.stack([jnp.arange(W) > 0, jnp.ones((W,), bool),
                    jnp.arange(W) < W - 1], axis=1).astype(jnp.float32)   # (W,3)
    u = jnp.einsum("bd,kldo->bklo", img, w_pool)                          # (B,3,3,out_c)
    pool_map = jnp.einsum("yk,xl,bklo->byxo", rv, cv, u)                  # (B,H,W,out_c)
    pool_map = jnp.pad(pool_map, ((0, 0), (0, 0), (0, W8 - W), (0, 0)))

    return bottleneck_conv_bn_prelu(out0, douts[0], douts[1], douts[2],
                                    pool_map, w_spatial, scb, shb,
                                    p["prelu_alpha"])   # (B, H, W8, out_c) f32


def encoder_forward(x_nchw, p, backbone_stride=4, align_corners=False):
    B, C_img, Hin, Win = x_nchw.shape
    x = jnp.transpose(x_nchw, (0, 2, 3, 1))                       # NCHW -> NHWC

    # TODO(synk): rn.ResNet backbone definition is not provided with the module;
    # stand-in backbone = stride-4 subsample + 1x1 projection + ReLU, done in
    # plain XLA (K=3 contraction is VPU work, not worth an MXU kernel).
    xs = x[:, ::backbone_stride, ::backbone_stride, :]
    feats = jax.nn.relu(jnp.einsum("bhwc,cf->bhwf", xs, p["backbone_w"])
                        + p["backbone_b"])

    aspp_out = aspp_forward(feats, p)          # (B, h, W8, out_c) f32, cols >= w padded
    _, h, W8, _ = aspp_out.shape
    w = feats.shape[2]

    features_nchw = jnp.transpose(aspp_out[:, :, :w, :], (0, 3, 1, 2))

    # main_classifier (1x1 conv) + bilinear upsample + Sigmoid, fused, NCHW out.
    rh = _bilinear_matrix(Hin, h, align_corners)
    rw = _bilinear_matrix(Win, w, align_corners)
    rwt = jnp.zeros((W8, Win), jnp.float32).at[:w, :].set(rw.T)   # zero pad rows
    annotation = classifier_upsample_sigmoid(aspp_out, p["cls_w"],
                                             p["cls_b"].reshape(1, -1), rh, rwt)
    return features_nchw, annotation


if __name__ == "__main__":
    key = jax.random.PRNGKey(0)
    B, C_IMG, HIN, WIN = 2, 3, 32, 32
    # Small stand-ins for the real (2048, 512, 256); kept as multiples of 128 so
    # every channel (lane) dimension stays lane-dense / unmasked, like the model.
    C_FEAT, DEPTH, OUT_C, NUM_CLASSES = 256, 128, 128, 4

    kx, kp = jax.random.split(key)
    x = jax.random.normal(kx, (B, C_IMG, HIN, WIN), jnp.float32)   # NCHW, like PyTorch
    params = init_params(kp, C_IMG, C_FEAT, DEPTH, OUT_C, NUM_CLASSES)

    features, annotation = encoder_forward(x, params)
    jax.block_until_ready((features, annotation))

    assert features.shape == (B, OUT_C, HIN // 4, WIN // 4)
    assert annotation.shape == (B, NUM_CLASSES, HIN, WIN)
    assert bool(jnp.all(jnp.isfinite(features)))
    assert bool(jnp.all(jnp.isfinite(annotation)))
    print("KERNEL_OK")
</pallas_src>

<mosaic_0001>
module attributes {stable_mosaic.version = 11 : i64} {
  func.func @_gap_conv_bn_relu_kernel(%arg0: i32, %arg1: memref<2x8x8x256xf32, #tpu.memory_space<vmem>>, %arg2: memref<256x128xf32, #tpu.memory_space<vmem>>, %arg3: memref<1x128xf32, #tpu.memory_space<vmem>>, %arg4: memref<1x128xf32, #tpu.memory_space<vmem>>, %arg5: memref<2x128xf32, #tpu.memory_space<vmem>>, %arg6: memref<2x256xf32, #tpu.memory_space<vmem>>) attributes {dimension_semantics = [#tpu.dimension_semantics<arbitrary>], iteration_bounds = array<i64: 1>, scalar_prefetch = 0 : i64, scratch_operands = 1 : i64, tpu.core_type = #tpu.core_type<tc>, window_params = [{transform_indices = @transform_0, window_bounds = array<i64: 2, 8, 8, 256>}, {pipeline_mode = #tpu.pipeline_mode<synchronous>, transform_indices = @transform_1, window_bounds = array<i64: 256, 128>}, {pipeline_mode = #tpu.pipeline_mode<synchronous>, transform_indices = @transform_2, window_bounds = array<i64: 1, 128>}, {pipeline_mode = #tpu.pipeline_mode<synchronous>, transform_indices = @transform_3, window_bounds = array<i64: 1, 128>}, {pipeline_mode = #tpu.pipeline_mode<synchronous>, transform_indices = @transform_4, window_bounds = array<i64: 2, 128>}]} {
    %c0 = arith.constant 0 : index
    %c0_0 = arith.constant 0 : index
    %c0_1 = arith.constant 0 : index
    %c0_2 = arith.constant 0 : index
    %0 = vector.load %arg1[%c0, %c0_0, %c0_1, %c0_2] : memref<2x8x8x256xf32, #tpu.memory_space<vmem>>, vector<2x8x8x256xf32>
    %cst = arith.constant dense<0.000000e+00> : vector<2x256xf32>
    %1 = vector.multi_reduction <add>, %0, %cst [1, 2] : vector<2x8x8x256xf32> to vector<2x256xf32>
    %c0_i32 = arith.constant 0 : i32
    %2 = arith.cmpi eq, %arg0, %c0_i32 : i32
    %3 = arith.extui %2 : i1 to i32
    %c0_i32_3 = arith.constant 0 : i32
    %4 = arith.cmpi ne, %3, %c0_i32_3 : i32
    scf.if %4 {
      %c0_8 = arith.constant 0 : index
      %c0_9 = arith.constant 0 : index
      %11 = vector.load %arg6[%c0_8, %c0_9] : memref<2x256xf32, #tpu.memory_space<vmem>>, vector<2x256xf32>
      tpu.vector_store %arg6[%c0_8, %c0_9], %1 {strides = array<i32>} : memref<2x256xf32, #tpu.memory_space<vmem>>, vector<2x256xf32>,
    } else {
    }
    %c0_i32_4 = arith.constant 0 : i32
    %5 = arith.cmpi ne, %arg0, %c0_i32_4 : i32
    %6 = arith.extui %5 : i1 to i32
    %c0_i32_5 = arith.constant 0 : i32
    %7 = arith.cmpi ne, %6, %c0_i32_5 : i32
    scf.if %7 {
      %c0_8 = arith.constant 0 : index
      %c0_9 = arith.constant 0 : index
      %11 = vector.load %arg6[%c0_8, %c0_9] : memref<2x256xf32, #tpu.memory_space<vmem>>, vector<2x256xf32>
      %12 = arith.addf %11, %1 : vector<2x256xf32>
      %c0_10 = arith.constant 0 : index
      %c0_11 = arith.constant 0 : index
      %13 = vector.load %arg6[%c0_10, %c0_11] : memref<2x256xf32, #tpu.memory_space<vmem>>, vector<2x256xf32>
      tpu.vector_store %arg6[%c0_10, %c0_11], %12 {strides = array<i32>} : memref<2x256xf32, #tpu.memory_space<vmem>>, vector<2x256xf32>,
    } else {
    }
    %c0_i32_6 = arith.constant 0 : i32
    %8 = arith.cmpi eq, %arg0, %c0_i32_6 : i32
    %9 = arith.extui %8 : i1 to i32
    %c0_i32_7 = arith.constant 0 : i32
    %10 = arith.cmpi ne, %9, %c0_i32_7 : i32
    scf.if %10 {
      %c0_8 = arith.constant 0 : index
      %c0_9 = arith.constant 0 : index
      %11 = vector.load %arg6[%c0_8, %c0_9] : memref<2x256xf32, #tpu.memory_space<vmem>>, vector<2x256xf32>
      %cst_10 = arith.constant 1.562500e-02 : f32
      %12 = vector.broadcast %cst_10 : f32 to vector<2x256xf32>
      %13 = arith.mulf %11, %12 : vector<2x256xf32>
      %c0_11 = arith.constant 0 : index
      %c0_12 = arith.constant 0 : index
      %14 = vector.load %arg2[%c0_11, %c0_12] : memref<256x128xf32, #tpu.memory_space<vmem>>, vector<256x128xf32>
      %cst_13 = arith.constant dense<0.000000e+00> : vector<2x128xf32>
      %15 = tpu.matmul %13, %14, %cst_13 {dimension_numbers = #tpu.dot_dimension_numbers<[1], [0], [0], [1], [0, 0, 1, 1], [], []>} : vector<2x256xf32>, vector<256x128xf32>, vector<2x128xf32> -> vector<2x128xf32>
      %c0_14 = arith.constant 0 : index
      %c0_15 = arith.constant 0 : index
      %16 = vector.load %arg3[%c0_14, %c0_15] : memref<1x128xf32, #tpu.memory_space<vmem>>, vector<1x128xf32>
      %17 = vector.broadcast %16 : vector<1x128xf32> to vector<2x128xf32>
      %18 = arith.mulf %15, %17 : vector<2x128xf32>
      %c0_16 = arith.constant 0 : index
      %c0_17 = arith.constant 0 : index
      %19 = vector.load %arg4[%c0_16, %c0_17] : memref<1x128xf32, #tpu.memory_space<vmem>>, vector<1x128xf32>
      %20 = vector.broadcast %19 : vector<1x128xf32> to vector<2x128xf32>
      %21 = arith.addf %18, %20 : vector<2x128xf32>
      %cst_18 = arith.constant 0.000000e+00 : f32
      %22 = vector.broadcast %cst_18 : f32 to vector<2x128xf32>
      %23 = arith.maximumf %21, %22 : vector<2x128xf32>
      %c0_19 = arith.constant 0 : index
      %c0_20 = arith.constant 0 : index
      %24 = vector.load %arg5[%c0_19, %c0_20] : memref<2x128xf32, #tpu.memory_space<vmem>>, vector<2x128xf32>
      tpu.vector_store %arg5[%c0_19, %c0_20], %23 {strides = array<i32>} : memref<2x128xf32, #tpu.memory_space<vmem>>, vector<2x128xf32>,
    } else {
    }
    return
  }
  func.func @transform_0(%arg0: i32) -> (i32, i32, i32, i32) {
    %c0_i32 = arith.constant 0 : i32
    %c0_i32_0 = arith.constant 0 : i32
    %c0_i32_1 = arith.constant 0 : i32
    %c0_i32_2 = arith.constant 0 : i32
    return %c0_i32, %arg0, %c0_i32_0, %c0_i32_1 : i32, i32, i32, i32
  }
  func.func @transform_1(%arg0: i32) -> (i32, i32) {
    %c0_i32 = arith.constant 0 : i32
    %c0_i32_0 = arith.constant 0 : i32
    %c0_i32_1 = arith.constant 0 : i32
    return %c0_i32, %c0_i32_0 : i32, i32
  }
  func.func @transform_2(%arg0: i32) -> (i32, i32) {
    %c0_i32 = arith.constant 0 : i32
    %c0_i32_0 = arith.constant 0 : i32
    %c0_i32_1 = arith.constant 0 : i32
    return %c0_i32, %c0_i32_0 : i32, i32
  }
  func.func @transform_3(%arg0: i32) -> (i32, i32) {
    %c0_i32 = arith.constant 0 : i32
    %c0_i32_0 = arith.constant 0 : i32
    %c0_i32_1 = arith.constant 0 : i32
    return %c0_i32, %c0_i32_0 : i32, i32
  }
  func.func @transform_4(%arg0: i32) -> (i32, i32) {
    %c0_i32 = arith.constant 0 : i32
    %c0_i32_0 = arith.constant 0 : i32
    %c0_i32_1 = arith.constant 0 : i32
    return %c0_i32, %c0_i32_0 : i32, i32
  }
}

</mosaic_0001>

<llo_original>
// kernel: tpu_custom_call.1
$region0: #{tpu_custom_call.1}
  #allocation0 [shape = 'u32[]', space=smem, size = 0x4, offset = 0x4, fixed_abs, tag = 'smem constant byte address 0x4 - core index']
  #allocation1 [shape = 'u32[144,128]{1,0:T(1,128)}', space=vmem, size = 0x12000, scoped, tag = 'internal scratch']
  #allocation2 [shape = 'f32[2,256]{1,0:T(2,128)}', space=vmem, size = 0x800, scoped, tag = 'scratch operand']
  %s0 = inlined_call_operand.hbm [shape: f32[2,8,8,256], index: 0, kind: input, shape index: {}]
  %s1 = inlined_call_operand.hbm [shape: f32[256,128], index: 1, kind: input, shape index: {}]
  %s2 = inlined_call_operand.vmem [shape: f32[1,128], index: 2, kind: input, shape index: {}]
  %s3 = inlined_call_operand.vmem [shape: f32[1,128], index: 3, kind: input, shape index: {}]
  %s4 = inlined_call_operand.hbm [shape: f32[2,128], index: 4, kind: output, shape index: {}]
  %s5 = sld [smem:[#allocation0]]
  $region46: #{tpu_custom_call.1} parent=0
    _
  %s7 = ssub.s32 1, %s5
  %s8 = scalar_select 0, %s7, %s5
  $region1: #{tpu_custom_call.1} parent=0
    #allocation3 [shape = 'u8[131072]{0}', space=vmem, size = 0x20000, scoped, tag = 'input window, operand 0, single buffered']
    #allocation4 [shape = 's32[1]{0}', space=sflag, size = 0x4, scoped, tag = 'scoped memory for tpu_custom_call.1']
    #allocation5 [shape = 's32[1]{0}', space=sflag, size = 0x4, scoped, tag = 'scoped memory for tpu_custom_call.1']
    #allocation6 [shape = 'u8[131072]{0}', space=vmem, size = 0x20000, scoped, tag = 'input window, operand 1, single buffered']
    #allocation7 [shape = 's32[1]{0}', space=sflag, size = 0x4, scoped, tag = 'scoped memory for tpu_custom_call.1']
    #allocation8 [shape = 'u8[1024]{0}', space=vmem, size = 0x400, scoped, tag = 'output window, operand 0, single buffered']
    %9 = vsyncpa [#allocation4], 0
    %10 = vsyncpa [#allocation7], 0
    %11 = vsyncpa [#allocation5], 0
    // Predicated region
    $region2: #{tpu_custom_call.1} parent=1 // pred_check
      _
    $region3: #{tpu_custom_call.1} parent=1 // pred_check_branch
      %13 = sbr.rel (0) target = $region5
    $region4: #{tpu_custom_call.1} parent=1 // pred_region
      %s15 = ssub.s32 4096, 4096
      %16 = vsyncadd [#allocation4], %s15
      %s17 = sshll.u32 [#allocation3], 4
      %s18 = int_to_ptr.vmem [resolvable:$true] %s17
      %23 = dma.hbm_to_vmem [thread:$0]  %s0, 4096, %s18, [#allocation4], 256, 256, 16
    $region5: #{tpu_custom_call.1} parent=1 // pred_fallthru
      _
    // Predicated region
    $region6: #{tpu_custom_call.1} parent=1 // pred_check
      _
    $region7: #{tpu_custom_call.1} parent=1 // pred_check_branch
      %25 = sbr.rel (0) target = $region9
    $region8: #{tpu_custom_call.1} parent=1 // pred_region
      %s27 = ssub.s32 4096, 4096
      %28 = vsyncadd [#allocation7], %s27
      %s29 = sshll.u32 [#allocation6], 4
      %s30 = int_to_ptr.vmem [resolvable:$true] %s29
      %35 = dma.hbm_to_vmem [thread:$0]  %s1, 4096, %s30, [#allocation7], 128, 128, 8
    $region9: #{tpu_custom_call.1} parent=1 // pred_fallthru
      _
    // Predicated region
    $region10: #{tpu_custom_call.1} parent=1 // pred_check
      _
    $region11: #{tpu_custom_call.1} parent=1 // pred_check_branch
      %37 = sbr.rel (0) target = $region13
    $region12: #{tpu_custom_call.1} parent=1 // pred_region
      _
    $region13: #{tpu_custom_call.1} parent=1 // pred_fallthru
      _
    // Predicated region
    $region14: #{tpu_custom_call.1} parent=1 // pred_check
      _
    $region15: #{tpu_custom_call.1} parent=1 // pred_check_branch
      %39 = sbr.rel (0) target = $region17
    $region16: #{tpu_custom_call.1} parent=1 // pred_region
      _
    $region17: #{tpu_custom_call.1} parent=1 // pred_fallthru
      _
    // Predicated region
    $region18: #{tpu_custom_call.1} parent=1 // pred_check
      _
    $region19: #{tpu_custom_call.1} parent=1 // pred_check_branch
      %41 = sbr.rel (0) target = $region21
    $region20: #{tpu_custom_call.1} parent=1 // pred_region
      %42 = dma.done [#allocation4], 4096
    $region21: #{tpu_custom_call.1} parent=1 // pred_fallthru
      _
    // Predicated region
    $region22: #{tpu_custom_call.1} parent=1 // pred_check
      _
    $region23: #{tpu_custom_call.1} parent=1 // pred_check_branch
      %44 = sbr.rel (0) target = $region25
    $region24: #{tpu_custom_call.1} parent=1 // pred_region
      %45 = dma.done [#allocation7], 4096
    $region25: #{tpu_custom_call.1} parent=1 // pred_fallthru
      _
    %v46 = vld [vmem:[#allocation3] sm:$0xff]
    %v47 = vld [vmem:[#allocation3 + $0x8] sm:$0xff]
    %v48 = vld [vmem:[#allocation3 + $0x10] sm:$0xff]
    %v49 = vld [vmem:[#allocation3 + $0x18] sm:$0xff]
    %v50 = vld [vmem:[#allocation3 + $0x20] sm:$0xff]
    %v51 = vld [vmem:[#allocation3 + $0x28] sm:$0xff]
    %v52 = vld [vmem:[#allocation3 + $0x30] sm:$0xff]
    %v53 = vld [vmem:[#allocation3 + $0x38] sm:$0xff]
    %v54 = vld [vmem:[#allocation3 + $0x40] sm:$0xff]
    %v55 = vld [vmem:[#allocation3 + $0x48] sm:$0xff]
    %v56 = vld [vmem:[#allocation3 + $0x50] sm:$0xff]
    %v57 = vld [vmem:[#allocation3 + $0x58] sm:$0xff]
    %v58 = vld [vmem:[#allocation3 + $0x60] sm:$0xff]
    %v59 = vld [vmem:[#allocation3 + $0x68] sm:$0xff]
    %v60 = vld [vmem:[#allocation3 + $0x70] sm:$0xff]
    %v61 = vld [vmem:[#allocation3 + $0x78] sm:$0xff]
    %v62 = vld [vmem:[#allocation3 + $0x80] sm:$0xff]
    %v63 = vld [vmem:[#allocation3 + $0x88] sm:$0xff]
    %v64 = vld [vmem:[#allocation3 + $0x90] sm:$0xff]
    %v65 = vld [vmem:[#allocation3 + $0x98] sm:$0xff]
    %v66 = vld [vmem:[#allocation3 + $0xa0] sm:$0xff]
    %v67 = vld [vmem:[#allocation3 + $0xa8] sm:$0xff]
    %v68 = vld [vmem:[#allocation3 + $0xb0] sm:$0xff]
    %v69 = vld [vmem:[#allocation3 + $0xb8] sm:$0xff]
    %v70 = vld [vmem:[#allocation3 + $0xc0] sm:$0xff]
    %v71 = vld [vmem:[#allocation3 + $0xc8] sm:$0xff]
    %v72 = vld [vmem:[#allocation3 + $0xd0] sm:$0xff]
    %v73 = vld [vmem:[#allocation3 + $0xd8] sm:$0xff]
    %v74 = vld [vmem:[#allocation3 + $0xe0] sm:$0xff]
    %v75 = vld [vmem:[#allocation3 + $0xe8] sm:$0xff]
    %v76 = vld [vmem:[#allocation3 + $0xf0] sm:$0xff]
    %v77 = vld [vmem:[#allocation3 + $0xf8] sm:$0xff]
    %v78 = vadd.f32 %v46, %v48
    %v79 = vadd.f32 %v78, %v50
    %v80 = vadd.f32 %v79, %v52
    %v81 = vadd.f32 %v80, %v54
    %v82 = vadd.f32 %v81, %v56
    %v83 = vadd.f32 %v82, %v58
    %v84 = vadd.f32 %v83, %v60
    %v85 = vrot.slane %v84, 4
    %v86 = vadd.f32 %v84, %v85
    %v87 = vrot.slane %v86, 2
    %v88 = vadd.f32 %v86, %v87
    %v89 = vrot.slane %v88, 1
    %v90 = vadd.f32 %v88, %v89
    %v91 = vadd.f32 %v47, %v49
    %v92 = vadd.f32 %v91, %v51
    %v93 = vadd.f32 %v92, %v53
    %v94 = vadd.f32 %v93, %v55
    %v95 = vadd.f32 %v94, %v57
    %v96 = vadd.f32 %v95, %v59
    %v97 = vadd.f32 %v96, %v61
    %v98 = vrot.slane %v97, 4
    %v99 = vadd.f32 %v97, %v98
    %v100 = vrot.slane %v99, 2
    %v101 = vadd.f32 %v99, %v100
    %v102 = vrot.slane %v101, 1
    %v103 = vadd.f32 %v101, %v102
    %v104 = vadd.f32 %v62, %v64
    %v105 = vadd.f32 %v104, %v66
    %v106 = vadd.f32 %v105, %v68
    %v107 = vadd.f32 %v106, %v70
    %v108 = vadd.f32 %v107, %v72
    %v109 = vadd.f32 %v108, %v74
    %v110 = vadd.f32 %v109, %v76
    %v111 = vrot.slane %v110, 4
    %v112 = vadd.f32 %v110, %v111
    %v113 = vrot.slane %v112, 2
    %v114 = vadd.f32 %v112, %v113
    %v115 = vrot.slane %v114, 1
    %v116 = vadd.f32 %v114, %v115
    %v117 = vadd.f32 %v63, %v65
    %v118 = vadd.f32 %v117, %v67
    %v119 = vadd.f32 %v118, %v69
    %v120 = vadd.f32 %v119, %v71
    %v121 = vadd.f32 %v120, %v73
    %v122 = vadd.f32 %v121, %v75
    %v123 = vadd.f32 %v122, %v77
    %v124 = vrot.slane %v123, 4
    %v125 = vadd.f32 %v123, %v124
    %v126 = vrot.slane %v125, 2
    %v127 = vadd.f32 %v125, %v126
    %v128 = vrot.slane %v127, 1
    %v129 = vadd.f32 %v127, %v128
    %p130 = scmp.eq.s32.totalorder 0, 0
    // Predicated region
    $region26: #{tpu_custom_call.1} parent=1 // pred_check
      %p131 = pneg %p130
    $region27: #{tpu_custom_call.1} parent=1 // pred_check_branch
      %133 = sbr.rel (%p131) target = $region29
    $region28: #{tpu_custom_call.1} parent=1 // pred_region
      %v138 = vcombine.low %v90, %v103
      %v140 = vunpack.c.l.s4 1983009808
      %v141 = vunpack.c.0.s8 %v140
      %v142 = vlaneseq
      %v143 = vshrl.u32 %v142, 7
      %v144 = vsub.s32 %v141, %v143
      %v145 = vrot.slane %v138, %v144
      %v146 = vcombine.low %v116, %v129
      %v148 = vunpack.c.l.s4 1983009808
      %v149 = vunpack.c.0.s8 %v148
      %v150 = vlaneseq
      %v151 = vshrl.u32 %v150, 7
      %v152 = vsub.s32 %v149, %v151
      %v153 = vrot.slane %v146, %v152
      %vm154 = vcmask 1044484
      %v155 = vsel %vm154, %v145, %v145
      %vm156 = vcmask 1046534
      %v157 = vsel %vm156, %v145, %v155
      %v158 = vrot.slane %v153, 7
      %vm159 = vcmask 1041409
      %v160 = vsel %vm159, %v158, %v157
      %vm161 = vcmask 1043459
      %v162 = vsel %vm161, %v158, %v160
      %vm163 = vcmask 1045509
      %v164 = vsel %vm163, %v158, %v162
      %vm165 = vcmask 1047559
      %v166 = vsel %vm165, %v158, %v164
      %168 = vst [vmem:[#allocation2] sm:$0xf] %v166
    $region29: #{tpu_custom_call.1} parent=1 // pred_fallthru
      _
    %p169 = scmp.ne.s32.totalorder 0, 0
    // Predicated region
    $region30: #{tpu_custom_call.1} parent=1 // pred_check
      %p170 = pneg %p169
    $region31: #{tpu_custom_call.1} parent=1 // pred_check_branch
      %172 = sbr.rel (%p170) target = $region33
    $region32: #{tpu_custom_call.1} parent=1 // pred_region
      %v173 = vld [vmem:[#allocation2] sm:$0xf]
      %v178 = vcombine.low %v90, %v103
      %v180 = vunpack.c.l.s4 1983009808
      %v181 = vunpack.c.0.s8 %v180
      %v182 = vlaneseq
      %v183 = vshrl.u32 %v182, 7
      %v184 = vsub.s32 %v181, %v183
      %v185 = vrot.slane %v178, %v184
      %v186 = vcombine.low %v116, %v129
      %v188 = vunpack.c.l.s4 1983009808
      %v189 = vunpack.c.0.s8 %v188
      %v190 = vlaneseq
      %v191 = vshrl.u32 %v190, 7
      %v192 = vsub.s32 %v189, %v191
      %v193 = vrot.slane %v186, %v192
      %vm194 = vcmask 1044484
      %v195 = vsel %vm194, %v185, %v185
      %vm196 = vcmask 1046534
      %v197 = vsel %vm196, %v185, %v195
      %v198 = vrot.slane %v193, 7
      %vm199 = vcmask 1041409
      %v200 = vsel %vm199, %v198, %v197
      %vm201 = vcmask 1043459
      %v202 = vsel %vm201, %v198, %v200
      %vm203 = vcmask 1045509
      %v204 = vsel %vm203, %v198, %v202
      %vm205 = vcmask 1047559
      %v206 = vsel %vm205, %v198, %v204
      %v208 = vadd.f32 %v173, %v206
      %209 = vst [vmem:[#allocation2] sm:$0xf] %v208
    $region33: #{tpu_custom_call.1} parent=1 // pred_fallthru
      _
    // Predicated region
    $region34: #{tpu_custom_call.1} parent=1 // pred_check
      %p210 = pneg %p130
    $region35: #{tpu_custom_call.1} parent=1 // pred_check_branch
      %212 = sbr.rel (%p210) target = $region37
    $region36: #{tpu_custom_call.1} parent=1 // pred_region
      %v213 = vld [vmem:[#allocation2] sm:$0xf]
      %v214 = vmul.f32 %v213, 0.015625
      %v215 = vld [vmem:[#allocation6] sm:$0xff]
      %v216 = vld [vmem:[#allocation6 + $0x8] sm:$0xff]
      %v217 = vld [vmem:[#allocation6 + $0x10] sm:$0xff]
      %v218 = vld [vmem:[#allocation6 + $0x18] sm:$0xff]
      %v219 = vld [vmem:[#allocation6 + $0x20] sm:$0xff]
      %v220 = vld [vmem:[#allocation6 + $0x28] sm:$0xff]
      %v221 = vld [vmem:[#allocation6 + $0x30] sm:$0xff]
      %v222 = vld [vmem:[#allocation6 + $0x38] sm:$0xff]
      %v223 = vld [vmem:[#allocation6 + $0x40] sm:$0xff]
      %v224 = vld [vmem:[#allocation6 + $0x48] sm:$0xff]
      %v225 = vld [vmem:[#allocation6 + $0x50] sm:$0xff]
      %v226 = vld [vmem:[#allocation6 + $0x58] sm:$0xff]
      %v227 = vld [vmem:[#allocation6 + $0x60] sm:$0xff]
      %v228 = vld [vmem:[#allocation6 + $0x68] sm:$0xff]
      %v229 = vld [vmem:[#allocation6 + $0x70] sm:$0xff]
      %v230 = vld [vmem:[#allocation6 + $0x78] sm:$0xff]
      %v231 = vld [vmem:[#allocation6 + $0x80] sm:$0xff]
      %v232 = vld [vmem:[#allocation6 + $0x88] sm:$0xff]
      %v233 = vld [vmem:[#allocation6 + $0x90] sm:$0xff]
      %v234 = vld [vmem:[#allocation6 + $0x98] sm:$0xff]
      %v235 = vld [vmem:[#allocation6 + $0xa0] sm:$0xff]
      %v236 = vld [vmem:[#allocation6 + $0xa8] sm:$0xff]
      %v237 = vld [vmem:[#allocation6 + $0xb0] sm:$0xff]
      %v238 = vld [vmem:[#allocation6 + $0xb8] sm:$0xff]
      %v239 = vld [vmem:[#allocation6 + $0xc0] sm:$0xff]
      %v240 = vld [vmem:[#allocation6 + $0xc8] sm:$0xff]
      %v241 = vld [vmem:[#allocation6 + $0xd0] sm:$0xff]
      %v242 = vld [vmem:[#allocation6 + $0xd8] sm:$0xff]
      %v243 = vld [vmem:[#allocation6 + $0xe0] sm:$0xff]
      %v244 = vld [vmem:[#allocation6 + $0xe8] sm:$0xff]
      %v245 = vld [vmem:[#allocation6 + $0xf0] sm:$0xff]
      %v246 = vld [vmem:[#allocation6 + $0xf8] sm:$0xff]
      %v249 = vunpack.c.l.s4 1983009808
      %v250 = vunpack.c.0.s8 %v249
      %v251 = vlaneseq
      %v252 = vshrl.u32 %v251, 7
      %v253 = vsub.s32 %v250, %v252
      %v254 = vrot.slane %v214, %v253
      %v255 = vcombine.high %v254, %v254
      %258 = vmatprep.subr.mxu0 0.0
      %259 = vmatpush1.msra.mxu0 %v215
      %260 = vmatprep.subr.mxu0 0.0
      %261 = vmatpush1.msra.mxu0 %v216
      %262 = vmatprep.subr.mxu0 0.0
      %263 = vmatpush1.msra.mxu0 %v217
      %264 = vmatprep.subr.mxu0 0.0
      %265 = vmatpush1.msra.mxu0 %v218
      %266 = vmatprep.subr.mxu0 0.0
      %267 = vmatpush1.msra.mxu0 %v219
      %268 = vmatprep.subr.mxu0 0.0
      %269 = vmatpush1.msra.mxu0 %v220
      %270 = vmatprep.subr.mxu0 0.0
      %271 = vmatpush1.msra.mxu0 %v221
      %272 = vmatprep.subr.mxu0 0.0
      %273 = vmatpush1.msra.mxu0 %v222
      %274 = vmatprep.subr.mxu0 0.0
      %275 = vmatpush1.msra.mxu0 %v223
      %276 = vmatprep.subr.mxu0 0.0
      %277 = vmatpush1.msra.mxu0 %v224
      %278 = vmatprep.subr.mxu0 0.0
      %279 = vmatpush1.msra.mxu0 %v225
      %280 = vmatprep.subr.mxu0 0.0
      %281 = vmatpush1.msra.mxu0 %v226
      %282 = vmatprep.subr.mxu0 0.0
      %283 = vmatpush1.msra.mxu0 %v227
      %284 = vmatprep.subr.mxu0 0.0
      %285 = vmatpush1.msra.mxu0 %v228
      %286 = vmatprep.subr.mxu0 0.0
      %287 = vmatpush1.msra.mxu0 %v229
      %288 = vmatprep.subr.mxu0 0.0
      %289 = vmatpush1.msra.mxu0 %v230
      %290 = vmatprep.subr.mxu0 0.0
      %291 = vmatpush1.msra.mxu0 %v231
      %292 = vmatprep.subr.mxu0 0.0
      %293 = vmatpush1.msra.mxu0 %v232
      %294 = vmatprep.subr.mxu0 0.0
      %295 = vmatpush1.msra.mxu0 %v233
      %296 = vmatprep.subr.mxu0 0.0
      %297 = vmatpush1.msra.mxu0 %v234
      %298 = vmatprep.subr.mxu0 0.0
      %299 = vmatpush1.msra.mxu0 %v235
      %300 = vmatprep.subr.mxu0 0.0
      %301 = vmatpush1.msra.mxu0 %v236
      %302 = vmatprep.subr.mxu0 0.0
      %303 = vmatpush1.msra.mxu0 %v237
      %304 = vmatprep.subr.mxu0 0.0
      %305 = vmatpush1.msra.mxu0 %v238
      %306 = vmatprep.subr.mxu0 0.0
      %307 = vmatpush1.msra.mxu0 %v239
      %308 = vmatprep.subr.mxu0 0.0
      %309 = vmatpush1.msra.mxu0 %v240
      %310 = vmatprep.subr.mxu0 0.0
      %311 = vmatpush1.msra.mxu0 %v241
      %312 = vmatprep.subr.mxu0 0.0
      %313 = vmatpush1.msra.mxu0 %v242
      %314 = vmatprep.subr.mxu0 0.0
      %315 = vmatpush1.msra.mxu0 %v243
      %316 = vmatprep.subr.mxu0 0.0
      %317 = vmatpush1.msra.mxu0 %v244
      %318 = vmatprep.subr.mxu0 0.0
      %319 = vmatpush1.msra.mxu0 %v245
      %320 = vmatprep.subr.mxu0 0.0
      %321 = vmatpush1.msra.mxu0 %v246
      %322 = vmatprep.mubr.f32.mxu0 %v255
      %323 = vmatmul.mubr.f32.gmra.mrb[0].mxu0 %v254
      %v324 = vpop.f32.mrb[0].mxu0
      %v325 = vadd.f32 0.0, %v324
      %v326 = vpop.f32.mrb[0].mxu0
      %327 = vdwg.mxu0
      %v328 = vld [vmem:[%s2] sm:$0x1]
      %v330 = vlaneseq
      %v331 = vshrl.u32 %v330, 7
      %v332 = vsub.s32 0, %v331
      %v333 = vrot.slane %v328, %v332
      %v335 = vmul.f32 %v325, %v333
      %v336 = vld [vmem:[%s3] sm:$0x1]
      %v338 = vlaneseq
      %v339 = vshrl.u32 %v338, 7
      %v340 = vsub.s32 0, %v339
      %v341 = vrot.slane %v336, %v340
      %v343 = vadd.f32 %v335, %v341
      %v344 = vmax.f32 %v343, 0.0
      %345 = vst [vmem:[#allocation8] sm:$0x3] %v344
    $region37: #{tpu_custom_call.1} parent=1 // pred_fallthru
      _
    // Predicated region
    $region38: #{tpu_custom_call.1} parent=1 // pred_check
      _
    $region39: #{tpu_custom_call.1} parent=1 // pred_check_branch
      %347 = sbr.rel (0) target = $region41
    $region40: #{tpu_custom_call.1} parent=1 // pred_region
      %s349 = ssub.s32 32, 32
      %350 = vsyncadd [#allocation5], %s349
      %s352 = sshll.u32 [#allocation8], 4
      %s353 = int_to_ptr.vmem [resolvable:$true] %s352
      %355 = dma.vmem_to_hbm [thread:$0]  %s353, 32, %s4, [#allocation5]
    $region41: #{tpu_custom_call.1} parent=1 // pred_fallthru
      _
    // Predicated region
    $region42: #{tpu_custom_call.1} parent=1 // pred_check
      _
    $region43: #{tpu_custom_call.1} parent=1 // pred_check_branch
      %357 = sbr.rel (0) target = $region45
    $region44: #{tpu_custom_call.1} parent=1 // pred_region
      %358 = dma.done [#allocation5], 32
    $region45: #{tpu_custom_call.1} parent=1 // pred_fallthru
      _
    %359 = vsyncpa [#allocation4], 1
    %360 = vsyncpa [#allocation7], 1
    %361 = vsyncpa [#allocation5], 1

</llo_original>
